<compile_context>
chip_gen: v7x
topology: tpu7x:2x2x1
jax: 0.10.0
libtpu: 0.0.40
codegen_flags: <defaults>
</compile_context>

<pallas_src>
import functools
import math

import numpy as np

import jax
import jax.numpy as jnp
from jax.experimental import pallas as pl
from jax.experimental.pallas import tpu as pltpu

_MiB = 1024 * 1024


def _round_up(x, m):
    return ((x + m - 1) // m) * m


def _tpu_info():
    """Returns (vmem_capacity_bytes, device_kind, use_bf16_tanh)."""
    kind = "unknown"
    try:
        kind = jax.devices()[0].device_kind.lower()
    except Exception:
        pass
    vmem_cap = None
    try:
        vmem_cap = int(pltpu.get_tpu_info().vmem_capacity_bytes)
    except Exception:
        vmem_cap = None
    if not vmem_cap or vmem_cap <= 0:
        vmem_cap = (64 if "v7" in kind else 128) * _MiB
    # bf16 EUP exists on v6e/v7x; keep f32 tanh on v5e and older.
    use_bf16_tanh = ("v6" in kind) or ("v7" in kind)
    return vmem_cap, kind, use_bf16_tanh


def _pick_tm(M, block_m, fixed_bytes, per_row_bytes, budget, kind):
    """Largest row tile (multiple of 16) fitting the VMEM budget; on v7x cap so
    there are >=2 grid steps for the two TensorCores."""
    block_m = max(16, _round_up(block_m, 16))
    TM = min(block_m, _round_up(M, 16))
    while TM > 16 and fixed_bytes + TM * per_row_bytes > budget:
        TM = _round_up(TM // 2, 16)
    TM = max(16, _round_up(TM, 16))
    if "v7" in kind and M >= 32:
        TM = min(TM, max(16, _round_up((M + 1) // 2, 16)))
    return TM


# ---------------------------------------------------------------------------
# Fused kernel: runs the whole FCBlock on one row-tile of the input.
#   x_ref : (TM, P_in)   bf16 zero-padded activation tile
#   w_ref : (L, P, P)    bf16 stacked weights (stored transposed: in x out)
#   b_ref : (L, 1, P)    f32  stacked biases
#   o_ref : (TM, P_out)  f32  output tile
# ---------------------------------------------------------------------------
def _fcblock_kernel(x_ref, w_ref, b_ref, o_ref, *, n_layers, outermost_linear,
                    p_in, p_out, tanh_bf16):
    P = w_ref.shape[1]
    h = x_ref[...]                                           # bf16 (TM, P_in)
    for l in range(n_layers):                                # static unroll
        is_last = (l == n_layers - 1)
        rows = p_in if l == 0 else P
        cols = p_out if is_last else P
        w = w_ref[l, :rows, :cols]                           # static ref slice
        b = b_ref[l, :, :cols]
        y = jnp.dot(h, w, preferred_element_type=jnp.float32) + b   # MXU + VPU
        if not (is_last and outermost_linear):
            y = jnp.tanh(y.astype(jnp.bfloat16)) if tanh_bf16 else jnp.tanh(y)
        h = y if is_last else y.astype(jnp.bfloat16)
    o_ref[...] = h.astype(o_ref.dtype)


# Per-layer fallback kernel (used only when the stacked weights don't fit VMEM).
def _fclayer_kernel(x_ref, w_ref, b_ref, o_ref, *, apply_tanh, tanh_bf16):
    y = jnp.dot(x_ref[...], w_ref[...],
                preferred_element_type=jnp.float32) + b_ref[...]
    if apply_tanh:
        y = jnp.tanh(y.astype(jnp.bfloat16)) if tanh_bf16 else jnp.tanh(y)
    o_ref[...] = y.astype(o_ref.dtype)


# ---------------------------------------------------------------------------
# Parameter construction (mirrors the PyTorch module's init) and packing.
# ---------------------------------------------------------------------------
def init_fcblock_params(key, hidden_ch, num_hidden_layers, in_features,
                        out_features, dtype=jnp.float32):
    """Weights: kaiming_normal_(fan_in, a=0, leaky_relu) -> std = sqrt(2/fan_in).
    Biases: PyTorch Linear default uniform(-1/sqrt(fan_in), 1/sqrt(fan_in)).
    Weights stored already transposed as (fan_in, fan_out)."""
    dims = [in_features] + [hidden_ch] * (num_hidden_layers + 1) + [out_features]
    params = []
    for fan_in, fan_out in zip(dims[:-1], dims[1:]):
        key, kw, kb = jax.random.split(key, 3)
        std = (2.0 / fan_in) ** 0.5
        w_t = jax.random.normal(kw, (fan_in, fan_out), dtype) * std
        bound = 1.0 / (fan_in ** 0.5)
        b = jax.random.uniform(kb, (fan_out,), dtype, minval=-bound, maxval=bound)
        params.append((w_t, b))
    return params


def pack_fcblock_params(params, pad_to=128):
    """Stack & zero-pad all layers to a common lane-dense width P (host-side,
    one device transfer -- hoisted out of the forward path so it is done once).
    Zero padding is exact: padded input cols hit zero weight rows, padded
    output cols get zero weight cols + zero bias."""
    L = len(params)
    in_features = params[0][0].shape[0]
    out_features = params[-1][0].shape[1]
    P = _round_up(max(max(w.shape) for w, _ in params), pad_to)
    w_all = np.zeros((L, P, P), np.float32)
    b_all = np.zeros((L, 1, P), np.float32)
    for l, (w_t, b) in enumerate(params):
        k, n = w_t.shape
        w_all[l, :k, :n] = np.asarray(w_t, np.float32)
        b_all[l, 0, :n] = np.asarray(b, np.float32)
    return {
        "w": jnp.asarray(w_all, jnp.bfloat16),
        "b": jnp.asarray(b_all, jnp.float32),
        "P": P,
        "P_in": _round_up(in_features, pad_to),
        "P_out": _round_up(out_features, pad_to),
        "in_features": in_features,
        "out_features": out_features,
        "n_layers": L,
    }


# ---------------------------------------------------------------------------
# Per-layer fallback (stacked weights too large for VMEM).
# ---------------------------------------------------------------------------
def _fcblock_forward_per_layer(params, x, outermost_linear, block_m,
                               tanh_bf16, budget, vmem_limit, kind):
    lead = x.shape[:-1]
    in_features = params[0][0].shape[0]
    out_features = params[-1][0].shape[1]
    M = int(math.prod(lead)) if lead else 1
    h = x.reshape(M, in_features)
    L = len(params)
    for l, (w_t, b) in enumerate(params):
        k, n = w_t.shape
        Kp, Np = _round_up(k, 128), _round_up(n, 128)
        wp = np.zeros((Kp, Np), np.float32)
        wp[:k, :n] = np.asarray(w_t, np.float32)
        bp = np.zeros((1, Np), np.float32)
        bp[0, :n] = np.asarray(b, np.float32)
        is_last = (l == L - 1)
        apply_tanh = not (is_last and outermost_linear)
        fixed = Kp * Np * 2 + Np * 4
        per_row = 4 * Kp + 8 * Np + 8 * Np
        # TODO(synk): if a single layer's weight alone exceeds VMEM, K/N
        # streaming inside the kernel would be needed; not implemented here.
        TM = _pick_tm(M, block_m, fixed, per_row, budget, kind)
        Mp = _round_up(M, TM)
        xp = jnp.pad(h.astype(jnp.bfloat16), ((0, Mp - M), (0, Kp - k)))
        kern = functools.partial(_fclayer_kernel, apply_tanh=apply_tanh,
                                 tanh_bf16=tanh_bf16)
        out_dtype = jnp.float32 if is_last else jnp.bfloat16
        y = pl.pallas_call(
            kern,
            out_shape=jax.ShapeDtypeStruct((Mp, Np), out_dtype),
            grid=(Mp // TM,),
            in_specs=[
                pl.BlockSpec((TM, Kp), lambda i: (i, 0)),
                pl.BlockSpec((Kp, Np), lambda i: (0, 0)),
                pl.BlockSpec((1, Np), lambda i: (0, 0)),
            ],
            out_specs=pl.BlockSpec((TM, Np), lambda i: (i, 0)),
            compiler_params=pltpu.CompilerParams(
                dimension_semantics=("parallel",),
                vmem_limit_bytes=int(vmem_limit)),
        )(xp, jnp.asarray(wp, jnp.bfloat16), jnp.asarray(bp, jnp.float32))
        h = y[:M, :n]
    return h.astype(jnp.float32).reshape(*lead, out_features)


# ---------------------------------------------------------------------------
# Forward: one fused pallas_call over an M-tiled grid.
# ---------------------------------------------------------------------------
def fcblock_forward(params, x, outermost_linear=False, block_m=None,
                    packed=None):
    """x: (..., in_features) -> (..., out_features) in f32."""
    vmem_cap, kind, tanh_bf16 = _tpu_info()
    vmem_limit = min(vmem_cap - 8 * _MiB, 100 * _MiB)     # ~56 MiB v7x, 100 MiB v5e/v6e
    budget = vmem_limit - 4 * _MiB                        # headroom for compiler scratch
    if block_m is None:
        block_m = 512 if "v7" in kind else 1024
    if packed is None:
        packed = pack_fcblock_params(params)

    w_all, b_all = packed["w"], packed["b"]
    L, P = packed["n_layers"], packed["P"]
    P_in, P_out = packed["P_in"], packed["P_out"]
    in_features, out_features = packed["in_features"], packed["out_features"]

    lead = x.shape[:-1]
    M = int(math.prod(lead)) if lead else 1
    x2d = x.reshape(M, in_features)

    # VMEM budget: single-buffered weights/bias + double-buffered bf16 input /
    # f32 output streams + in-kernel f32/bf16 temporaries (~8 bytes per P elem).
    w_bytes = int(w_all.size) * 2
    b_bytes = int(b_all.size) * 4
    fixed = w_bytes + b_bytes
    per_row = 4 * P_in + 8 * P_out + 8 * P
    if fixed + 16 * per_row > budget:
        # Stacked weights cannot stay resident -> per-layer Pallas fallback.
        return _fcblock_forward_per_layer(params, x, outermost_linear, block_m,
                                          tanh_bf16, budget, vmem_limit, kind)

    TM = _pick_tm(M, block_m, fixed, per_row, budget, kind)
    Mp = _round_up(M, TM)
    xp = jnp.pad(x2d.astype(jnp.bfloat16),
                 ((0, Mp - M), (0, P_in - in_features)))

    kernel = functools.partial(_fcblock_kernel, n_layers=L,
                               outermost_linear=outermost_linear,
                               p_in=P_in, p_out=P_out, tanh_bf16=tanh_bf16)

    def call(single_buffer_weights):
        wkw = ({"pipeline_mode": pl.Buffered(1)}
               if single_buffer_weights else {})
        return pl.pallas_call(
            kernel,
            out_shape=jax.ShapeDtypeStruct((Mp, P_out), jnp.float32),
            grid=(Mp // TM,),
            in_specs=[
                pl.BlockSpec((TM, P_in), lambda i: (i, 0)),          # activations
                pl.BlockSpec((L, P, P), lambda i: (0, 0, 0), **wkw), # resident W
                pl.BlockSpec((L, 1, P), lambda i: (0, 0, 0), **wkw), # resident b
            ],
            out_specs=pl.BlockSpec((TM, P_out), lambda i: (i, 0)),
            compiler_params=pltpu.CompilerParams(
                dimension_semantics=("parallel",),
                vmem_limit_bytes=int(vmem_limit)),
        )(xp, w_all, b_all)

    try:
        out_p = call(True)          # single-buffered resident weights
    except Exception:
        out_p = call(False)         # fallback: default double-buffering

    return out_p[:M, :out_features].reshape(*lead, out_features)


# ---------------------------------------------------------------------------
# Demo / smoke test
# ---------------------------------------------------------------------------
if __name__ == "__main__":
    key = jax.random.PRNGKey(0)
    k_in, k_params = jax.random.split(key)

    # Small shapes consistent with FCBlock usage: (batch, seq, in_features)
    batch, seq = 2, 8
    in_features, hidden_ch, out_features = 16, 32, 8
    num_hidden_layers = 2
    outermost_linear = False  # default branch: final layer is Linear+Tanh

    x = jax.random.normal(k_in, (batch, seq, in_features), jnp.float32)
    params = init_fcblock_params(k_params, hidden_ch, num_hidden_layers,
                                 in_features, out_features)

    packed = pack_fcblock_params(params)      # hoisted packing, done once
    out = fcblock_forward(params, x, outermost_linear=outermost_linear,
                          packed=packed)
    out = jax.block_until_ready(out)

    # Pure-JAX reference mirroring the kernel's bf16-MXU / f32-accumulate math.
    _, _, tanh_bf16 = _tpu_info()
    L = len(params)
    h = x.reshape(-1, in_features).astype(jnp.bfloat16)
    for i, (w_t, b) in enumerate(params):
        y = jnp.dot(h, w_t.astype(jnp.bfloat16),
                    preferred_element_type=jnp.float32) + b.astype(jnp.float32)
        is_last = (i == L - 1)
        if not (is_last and outermost_linear):
            y = jnp.tanh(y.astype(jnp.bfloat16)) if tanh_bf16 else jnp.tanh(y)
        h = y.astype(jnp.float32) if is_last else y.astype(jnp.bfloat16)
    ref = h.reshape(batch, seq, out_features)

    assert out.shape == (batch, seq, out_features), out.shape
    err = float(jnp.max(jnp.abs(out - ref)))
    assert jnp.allclose(out, ref, atol=5e-3, rtol=5e-3), err

    print("KERNEL_OK")
</pallas_src>

<mosaic_0001>
module attributes {stable_mosaic.version = 11 : i64} {
  func.func @_fcblock_kernel(%arg0: i32, %arg1: memref<16x128xbf16, #tpu.memory_space<vmem>>, %arg2: memref<4x128x128xbf16, #tpu.memory_space<vmem>>, %arg3: memref<4x1x128xf32, #tpu.memory_space<vmem>>, %arg4: memref<16x128xf32, #tpu.memory_space<vmem>>) attributes {dimension_semantics = [#tpu.dimension_semantics<parallel>], iteration_bounds = array<i64: 1>, scalar_prefetch = 0 : i64, scratch_operands = 0 : i64, tpu.core_type = #tpu.core_type<tc>, window_params = [{transform_indices = @transform_0, window_bounds = array<i64: 16, 128>}, {pipeline_mode = #tpu.pipeline_mode<synchronous>, transform_indices = @transform_1, window_bounds = array<i64: 4, 128, 128>}, {pipeline_mode = #tpu.pipeline_mode<synchronous>, transform_indices = @transform_2, window_bounds = array<i64: 4, 1, 128>}, {transform_indices = @transform_3, window_bounds = array<i64: 16, 128>}]} {
    %c0 = arith.constant 0 : index
    %c0_0 = arith.constant 0 : index
    %0 = vector.load %arg1[%c0, %c0_0] : memref<16x128xbf16, #tpu.memory_space<vmem>>, vector<16x128xbf16>
    %c0_1 = arith.constant 0 : index
    %c0_2 = arith.constant 0 : index
    %c0_3 = arith.constant 0 : index
    %1 = vector.load %arg2[%c0_1, %c0_2, %c0_3] : memref<4x128x128xbf16, #tpu.memory_space<vmem>>, vector<1x128x128xbf16>
    %2 = vector.shape_cast %1 : vector<1x128x128xbf16> to vector<128x128xbf16>
    %c0_4 = arith.constant 0 : index
    %c0_5 = arith.constant 0 : index
    %c0_6 = arith.constant 0 : index
    %3 = vector.load %arg3[%c0_4, %c0_5, %c0_6] : memref<4x1x128xf32, #tpu.memory_space<vmem>>, vector<1x1x128xf32>
    %4 = vector.shape_cast %3 : vector<1x1x128xf32> to vector<1x128xf32>
    %cst = arith.constant dense<0.000000e+00> : vector<16x128xf32>
    %5 = tpu.matmul %0, %2, %cst {dimension_numbers = #tpu.dot_dimension_numbers<[1], [0], [0], [1], [0, 0, 1, 1], [], []>} : vector<16x128xbf16>, vector<128x128xbf16>, vector<16x128xf32> -> vector<16x128xf32>
    %6 = vector.broadcast %4 : vector<1x128xf32> to vector<16x128xf32>
    %7 = arith.addf %5, %6 : vector<16x128xf32>
    %8 = math.tanh %7 : vector<16x128xf32>
    %9 = arith.truncf %8 : vector<16x128xf32> to vector<16x128xbf16>
    %c1 = arith.constant 1 : index
    %c0_7 = arith.constant 0 : index
    %c0_8 = arith.constant 0 : index
    %10 = vector.load %arg2[%c1, %c0_7, %c0_8] : memref<4x128x128xbf16, #tpu.memory_space<vmem>>, vector<1x128x128xbf16>
    %11 = vector.shape_cast %10 : vector<1x128x128xbf16> to vector<128x128xbf16>
    %c1_9 = arith.constant 1 : index
    %c0_10 = arith.constant 0 : index
    %c0_11 = arith.constant 0 : index
    %12 = vector.load %arg3[%c1_9, %c0_10, %c0_11] : memref<4x1x128xf32, #tpu.memory_space<vmem>>, vector<1x1x128xf32>
    %13 = vector.shape_cast %12 : vector<1x1x128xf32> to vector<1x128xf32>
    %cst_12 = arith.constant dense<0.000000e+00> : vector<16x128xf32>
    %14 = tpu.matmul %9, %11, %cst_12 {dimension_numbers = #tpu.dot_dimension_numbers<[1], [0], [0], [1], [0, 0, 1, 1], [], []>} : vector<16x128xbf16>, vector<128x128xbf16>, vector<16x128xf32> -> vector<16x128xf32>
    %15 = vector.broadcast %13 : vector<1x128xf32> to vector<16x128xf32>
    %16 = arith.addf %14, %15 : vector<16x128xf32>
    %17 = math.tanh %16 : vector<16x128xf32>
    %18 = arith.truncf %17 : vector<16x128xf32> to vector<16x128xbf16>
    %c2 = arith.constant 2 : index
    %c0_13 = arith.constant 0 : index
    %c0_14 = arith.constant 0 : index
    %19 = vector.load %arg2[%c2, %c0_13, %c0_14] : memref<4x128x128xbf16, #tpu.memory_space<vmem>>, vector<1x128x128xbf16>
    %20 = vector.shape_cast %19 : vector<1x128x128xbf16> to vector<128x128xbf16>
    %c2_15 = arith.constant 2 : index
    %c0_16 = arith.constant 0 : index
    %c0_17 = arith.constant 0 : index
    %21 = vector.load %arg3[%c2_15, %c0_16, %c0_17] : memref<4x1x128xf32, #tpu.memory_space<vmem>>, vector<1x1x128xf32>
    %22 = vector.shape_cast %21 : vector<1x1x128xf32> to vector<1x128xf32>
    %cst_18 = arith.constant dense<0.000000e+00> : vector<16x128xf32>
    %23 = tpu.matmul %18, %20, %cst_18 {dimension_numbers = #tpu.dot_dimension_numbers<[1], [0], [0], [1], [0, 0, 1, 1], [], []>} : vector<16x128xbf16>, vector<128x128xbf16>, vector<16x128xf32> -> vector<16x128xf32>
    %24 = vector.broadcast %22 : vector<1x128xf32> to vector<16x128xf32>
    %25 = arith.addf %23, %24 : vector<16x128xf32>
    %26 = math.tanh %25 : vector<16x128xf32>
    %27 = arith.truncf %26 : vector<16x128xf32> to vector<16x128xbf16>
    %c3 = arith.constant 3 : index
    %c0_19 = arith.constant 0 : index
    %c0_20 = arith.constant 0 : index
    %28 = vector.load %arg2[%c3, %c0_19, %c0_20] : memref<4x128x128xbf16, #tpu.memory_space<vmem>>, vector<1x128x128xbf16>
    %29 = vector.shape_cast %28 : vector<1x128x128xbf16> to vector<128x128xbf16>
    %c3_21 = arith.constant 3 : index
    %c0_22 = arith.constant 0 : index
    %c0_23 = arith.constant 0 : index
    %30 = vector.load %arg3[%c3_21, %c0_22, %c0_23] : memref<4x1x128xf32, #tpu.memory_space<vmem>>, vector<1x1x128xf32>
    %31 = vector.shape_cast %30 : vector<1x1x128xf32> to vector<1x128xf32>
    %cst_24 = arith.constant dense<0.000000e+00> : vector<16x128xf32>
    %32 = tpu.matmul %27, %29, %cst_24 {dimension_numbers = #tpu.dot_dimension_numbers<[1], [0], [0], [1], [0, 0, 1, 1], [], []>} : vector<16x128xbf16>, vector<128x128xbf16>, vector<16x128xf32> -> vector<16x128xf32>
    %33 = vector.broadcast %31 : vector<1x128xf32> to vector<16x128xf32>
    %34 = arith.addf %32, %33 : vector<16x128xf32>
    %35 = math.tanh %34 : vector<16x128xf32>
    %c0_25 = arith.constant 0 : index
    %c0_26 = arith.constant 0 : index
    %36 = vector.load %arg4[%c0_25, %c0_26] : memref<16x128xf32, #tpu.memory_space<vmem>>, vector<16x128xf32>
    tpu.vector_store %arg4[%c0_25, %c0_26], %35 {strides = array<i32>} : memref<16x128xf32, #tpu.memory_space<vmem>>, vector<16x128xf32>,
    return
  }
  func.func @transform_0(%arg0: i32) -> (i32, i32) {
    %c0_i32 = arith.constant 0 : i32
    %c0_i32_0 = arith.constant 0 : i32
    return %arg0, %c0_i32 : i32, i32
  }
  func.func @transform_1(%arg0: i32) -> (i32, i32, i32) {
    %c0_i32 = arith.constant 0 : i32
    %c0_i32_0 = arith.constant 0 : i32
    %c0_i32_1 = arith.constant 0 : i32
    %c0_i32_2 = arith.constant 0 : i32
    return %c0_i32, %c0_i32_0, %c0_i32_1 : i32, i32, i32
  }
  func.func @transform_2(%arg0: i32) -> (i32, i32, i32) {
    %c0_i32 = arith.constant 0 : i32
    %c0_i32_0 = arith.constant 0 : i32
    %c0_i32_1 = arith.constant 0 : i32
    %c0_i32_2 = arith.constant 0 : i32
    return %c0_i32, %c0_i32_0, %c0_i32_1 : i32, i32, i32
  }
  func.func @transform_3(%arg0: i32) -> (i32, i32) {
    %c0_i32 = arith.constant 0 : i32
    %c0_i32_0 = arith.constant 0 : i32
    return %arg0, %c0_i32 : i32, i32
  }
}

module attributes {stable_mosaic.version = 11 : i64} {
  func.func @_fcblock_kernel(%arg0: i32, %arg1: memref<16x128xbf16, #tpu.memory_space<vmem>>, %arg2: memref<4x128x128xbf16, #tpu.memory_space<vmem>>, %arg3: memref<4x1x128xf32, #tpu.memory_space<vmem>>, %arg4: memref<16x128xf32, #tpu.memory_space<vmem>>) attributes {dimension_semantics = [#tpu.dimension_semantics<parallel>], iteration_bounds = array<i64: 1>, scalar_prefetch = 0 : i64, scratch_operands = 0 : i64, tpu.core_type = #tpu.core_type<tc>, window_params = [{transform_indices = @transform_0, window_bounds = array<i64: 16, 128>}, {pipeline_mode = #tpu.pipeline_mode<synchronous>, transform_indices = @transform_1, window_bounds = array<i64: 4, 128, 128>}, {pipeline_mode = #tpu.pipeline_mode<synchronous>, transform_indices = @transform_2, window_bounds = array<i64: 4, 1, 128>}, {transform_indices = @transform_3, window_bounds = array<i64: 16, 128>}]} {
    %c0 = arith.constant 0 : index
    %c0_0 = arith.constant 0 : index
    %0 = vector.load %arg1[%c0, %c0_0] : memref<16x128xbf16, #tpu.memory_space<vmem>>, vector<16x128xbf16>
    %c0_1 = arith.constant 0 : index
    %c0_2 = arith.constant 0 : index
    %c0_3 = arith.constant 0 : index
    %1 = vector.load %arg2[%c0_1, %c0_2, %c0_3] : memref<4x128x128xbf16, #tpu.memory_space<vmem>>, vector<1x128x128xbf16>
    %2 = vector.shape_cast %1 : vector<1x128x128xbf16> to vector<128x128xbf16>
    %c0_4 = arith.constant 0 : index
    %c0_5 = arith.constant 0 : index
    %c0_6 = arith.constant 0 : index
    %3 = vector.load %arg3[%c0_4, %c0_5, %c0_6] : memref<4x1x128xf32, #tpu.memory_space<vmem>>, vector<1x1x128xf32>
    %4 = vector.shape_cast %3 : vector<1x1x128xf32> to vector<1x128xf32>
    %cst = arith.constant dense<0.000000e+00> : vector<16x128xf32>
    %5 = tpu.matmul %0, %2, %cst {dimension_numbers = #tpu.dot_dimension_numbers<[1], [0], [0], [1], [0, 0, 1, 1], [], []>} : vector<16x128xbf16>, vector<128x128xbf16>, vector<16x128xf32> -> vector<16x128xf32>
    %6 = vector.broadcast %4 : vector<1x128xf32> to vector<16x128xf32>
    %7 = arith.addf %5, %6 : vector<16x128xf32>
    %8 = math.tanh %7 : vector<16x128xf32>
    %9 = arith.truncf %8 : vector<16x128xf32> to vector<16x128xbf16>
    %c1 = arith.constant 1 : index
    %c0_7 = arith.constant 0 : index
    %c0_8 = arith.constant 0 : index
    %10 = vector.load %arg2[%c1, %c0_7, %c0_8] : memref<4x128x128xbf16, #tpu.memory_space<vmem>>, vector<1x128x128xbf16>
    %11 = vector.shape_cast %10 : vector<1x128x128xbf16> to vector<128x128xbf16>
    %c1_9 = arith.constant 1 : index
    %c0_10 = arith.constant 0 : index
    %c0_11 = arith.constant 0 : index
    %12 = vector.load %arg3[%c1_9, %c0_10, %c0_11] : memref<4x1x128xf32, #tpu.memory_space<vmem>>, vector<1x1x128xf32>
    %13 = vector.shape_cast %12 : vector<1x1x128xf32> to vector<1x128xf32>
    %cst_12 = arith.constant dense<0.000000e+00> : vector<16x128xf32>
    %14 = tpu.matmul %9, %11, %cst_12 {dimension_numbers = #tpu.dot_dimension_numbers<[1], [0], [0], [1], [0, 0, 1, 1], [], []>} : vector<16x128xbf16>, vector<128x128xbf16>, vector<16x128xf32> -> vector<16x128xf32>
    %15 = vector.broadcast %13 : vector<1x128xf32> to vector<16x128xf32>
    %16 = arith.addf %14, %15 : vector<16x128xf32>
    %17 = math.tanh %16 : vector<16x128xf32>
    %18 = arith.truncf %17 : vector<16x128xf32> to vector<16x128xbf16>
    %c2 = arith.constant 2 : index
    %c0_13 = arith.constant 0 : index
    %c0_14 = arith.constant 0 : index
    %19 = vector.load %arg2[%c2, %c0_13, %c0_14] : memref<4x128x128xbf16, #tpu.memory_space<vmem>>, vector<1x128x128xbf16>
    %20 = vector.shape_cast %19 : vector<1x128x128xbf16> to vector<128x128xbf16>
    %c2_15 = arith.constant 2 : index
    %c0_16 = arith.constant 0 : index
    %c0_17 = arith.constant 0 : index
    %21 = vector.load %arg3[%c2_15, %c0_16, %c0_17] : memref<4x1x128xf32, #tpu.memory_space<vmem>>, vector<1x1x128xf32>
    %22 = vector.shape_cast %21 : vector<1x1x128xf32> to vector<1x128xf32>
    %cst_18 = arith.constant dense<0.000000e+00> : vector<16x128xf32>
    %23 = tpu.matmul %18, %20, %cst_18 {dimension_numbers = #tpu.dot_dimension_numbers<[1], [0], [0], [1], [0, 0, 1, 1], [], []>} : vector<16x128xbf16>, vector<128x128xbf16>, vector<16x128xf32> -> vector<16x128xf32>
    %24 = vector.broadcast %22 : vector<1x128xf32> to vector<16x128xf32>
    %25 = arith.addf %23, %24 : vector<16x128xf32>
    %26 = math.tanh %25 : vector<16x128xf32>
    %27 = arith.truncf %26 : vector<16x128xf32> to vector<16x128xbf16>
    %c3 = arith.constant 3 : index
    %c0_19 = arith.constant 0 : index
    %c0_20 = arith.constant 0 : index
    %28 = vector.load %arg2[%c3, %c0_19, %c0_20] : memref<4x128x128xbf16, #tpu.memory_space<vmem>>, vector<1x128x128xbf16>
    %29 = vector.shape_cast %28 : vector<1x128x128xbf16> to vector<128x128xbf16>
    %c3_21 = arith.constant 3 : index
    %c0_22 = arith.constant 0 : index
    %c0_23 = arith.constant 0 : index
    %30 = vector.load %arg3[%c3_21, %c0_22, %c0_23] : memref<4x1x128xf32, #tpu.memory_space<vmem>>, vector<1x1x128xf32>
    %31 = vector.shape_cast %30 : vector<1x1x128xf32> to vector<1x128xf32>
    %cst_24 = arith.constant dense<0.000000e+00> : vector<16x128xf32>
    %32 = tpu.matmul %27, %29, %cst_24 {dimension_numbers = #tpu.dot_dimension_numbers<[1], [0], [0], [1], [0, 0, 1, 1], [], []>} : vector<16x128xbf16>, vector<128x128xbf16>, vector<16x128xf32> -> vector<16x128xf32>
    %33 = vector.broadcast %31 : vector<1x128xf32> to vector<16x128xf32>
    %34 = arith.addf %32, %33 : vector<16x128xf32>
    %35 = math.tanh %34 : vector<16x128xf32>
    %c0_25 = arith.constant 0 : index
    %c0_26 = arith.constant 0 : index
    %36 = vector.load %arg4[%c0_25, %c0_26] : memref<16x128xf32, #tpu.memory_space<vmem>>, vector<16x128xf32>
    tpu.vector_store %arg4[%c0_25, %c0_26], %35 {strides = array<i32>} : memref<16x128xf32, #tpu.memory_space<vmem>>, vector<16x128xf32>,
    return
  }
  func.func @transform_0(%arg0: i32) -> (i32, i32) {
    %c0_i32 = arith.constant 0 : i32
    %c0_i32_0 = arith.constant 0 : i32
    return %arg0, %c0_i32 : i32, i32
  }
  func.func @transform_1(%arg0: i32) -> (i32, i32, i32) {
    %c0_i32 = arith.constant 0 : i32
    %c0_i32_0 = arith.constant 0 : i32
    %c0_i32_1 = arith.constant 0 : i32
    %c0_i32_2 = arith.constant 0 : i32
    return %c0_i32, %c0_i32_0, %c0_i32_1 : i32, i32, i32
  }
  func.func @transform_2(%arg0: i32) -> (i32, i32, i32) {
    %c0_i32 = arith.constant 0 : i32
    %c0_i32_0 = arith.constant 0 : i32
    %c0_i32_1 = arith.constant 0 : i32
    %c0_i32_2 = arith.constant 0 : i32
    return %c0_i32, %c0_i32_0, %c0_i32_1 : i32, i32, i32
  }
  func.func @transform_3(%arg0: i32) -> (i32, i32) {
    %c0_i32 = arith.constant 0 : i32
    %c0_i32_0 = arith.constant 0 : i32
    return %arg0, %c0_i32 : i32, i32
  }
}

</mosaic_0001>

<llo_original>
// kernel: tpu_custom_call.1
$region0: #{tpu_custom_call.1}
  #allocation0 [shape = 'u32[]', space=smem, size = 0x4, offset = 0x4, fixed_abs, tag = 'smem constant byte address 0x4 - core index']
  #allocation1 [shape = 'u32[144,128]{1,0:T(1,128)}', space=vmem, size = 0x12000, scoped, tag = 'internal scratch']
  %s0 = inlined_call_operand.hbm [shape: bf16[16,128], index: 0, kind: input, shape index: {}]
  %s1 = inlined_call_operand.hbm [shape: bf16[4,128,128], index: 1, kind: input, shape index: {}]
  %s2 = inlined_call_operand.hbm [shape: f32[4,1,128], index: 2, kind: input, shape index: {}]
  %s3 = inlined_call_operand.hbm [shape: f32[16,128], index: 3, kind: output, shape index: {}]
  %s4 = sld [smem:[#allocation0]]
  $region34: #{tpu_custom_call.1} parent=0
    _
  %s6 = ssub.s32 1, %s4
  %s7 = scalar_select 0, %s6, %s4
  $region1: #{tpu_custom_call.1} parent=0
    #allocation2 [shape = 'u8[4096]{0}', space=vmem, size = 0x1000, scoped, tag = 'input window, operand 0, single buffered']
    #allocation3 [shape = 's32[1]{0}', space=sflag, size = 0x4, scoped, tag = 'scoped memory for tpu_custom_call.1']
    #allocation4 [shape = 's32[1]{0}', space=sflag, size = 0x4, scoped, tag = 'scoped memory for tpu_custom_call.1']
    #allocation5 [shape = 'u8[131072]{0}', space=vmem, size = 0x20000, scoped, tag = 'input window, operand 1, single buffered']
    #allocation6 [shape = 's32[1]{0}', space=sflag, size = 0x4, scoped, tag = 'scoped memory for tpu_custom_call.1']
    #allocation7 [shape = 'u8[2048]{0}', space=vmem, size = 0x800, scoped, tag = 'input window, operand 2, single buffered']
    #allocation8 [shape = 'u8[8192]{0}', space=vmem, size = 0x2000, scoped, tag = 'output window, operand 0, single buffered']
    %8 = vsyncpa [#allocation3], 0
    %9 = vsyncpa [#allocation6], 0
    %10 = vsyncpa [#allocation4], 0
    // Predicated region
    $region2: #{tpu_custom_call.1} parent=1 // pred_check
      _
    $region3: #{tpu_custom_call.1} parent=1 // pred_check_branch
      %12 = sbr.rel (0) target = $region5
    $region4: #{tpu_custom_call.1} parent=1 // pred_region
      %s14 = ssub.s32 128, 128
      %15 = vsyncadd [#allocation3], %s14
      %s16 = sshll.u32 [#allocation2], 4
      %s17 = int_to_ptr.vmem [resolvable:$true] %s16
      %22 = dma.hbm_to_vmem [thread:$0]  %s0, 128, %s17, [#allocation3], 64, 64, 4
    $region5: #{tpu_custom_call.1} parent=1 // pred_fallthru
      _
    // Predicated region
    $region6: #{tpu_custom_call.1} parent=1 // pred_check
      _
    $region7: #{tpu_custom_call.1} parent=1 // pred_check_branch
      %24 = sbr.rel (0) target = $region9
    $region8: #{tpu_custom_call.1} parent=1 // pred_region
      %s26 = ssub.s32 4096, 4096
      %27 = vsyncadd [#allocation6], %s26
      %s28 = sshll.u32 [#allocation5], 4
      %s29 = int_to_ptr.vmem [resolvable:$true] %s28
      %34 = dma.hbm_to_vmem [thread:$0]  %s1, 4096, %s29, [#allocation6], 64, 64, 4
    $region9: #{tpu_custom_call.1} parent=1 // pred_fallthru
      _
    // Predicated region
    $region10: #{tpu_custom_call.1} parent=1 // pred_check
      _
    $region11: #{tpu_custom_call.1} parent=1 // pred_check_branch
      %36 = sbr.rel (0) target = $region13
    $region12: #{tpu_custom_call.1} parent=1 // pred_region
      %s38 = ssub.s32 64, 64
      %39 = vsyncadd [#allocation6], %s38
      %s40 = sshll.u32 [#allocation7], 4
      %s41 = int_to_ptr.vmem [resolvable:$true] %s40
      %46 = dma.hbm_to_vmem [thread:$0]  %s2, 64, %s41, [#allocation6], 16, 16, 1
    $region13: #{tpu_custom_call.1} parent=1 // pred_fallthru
      _
    // Predicated region
    $region14: #{tpu_custom_call.1} parent=1 // pred_check
      _
    $region15: #{tpu_custom_call.1} parent=1 // pred_check_branch
      %48 = sbr.rel (0) target = $region17
    $region16: #{tpu_custom_call.1} parent=1 // pred_region
      %49 = dma.done [#allocation3], 128
    $region17: #{tpu_custom_call.1} parent=1 // pred_fallthru
      _
    // Predicated region
    $region18: #{tpu_custom_call.1} parent=1 // pred_check
      _
    $region19: #{tpu_custom_call.1} parent=1 // pred_check_branch
      %51 = sbr.rel (0) target = $region21
    $region20: #{tpu_custom_call.1} parent=1 // pred_region
      %52 = dma.done [#allocation6], 4096
    $region21: #{tpu_custom_call.1} parent=1 // pred_fallthru
      _
    // Predicated region
    $region22: #{tpu_custom_call.1} parent=1 // pred_check
      _
    $region23: #{tpu_custom_call.1} parent=1 // pred_check_branch
      %54 = sbr.rel (0) target = $region25
    $region24: #{tpu_custom_call.1} parent=1 // pred_region
      %55 = dma.done [#allocation6], 64
    $region25: #{tpu_custom_call.1} parent=1 // pred_fallthru
      _
    %v57 = vld [vmem:[#allocation2] sm:$0xf]
    %v58 = vld [vmem:[#allocation2 + $0x4] sm:$0xf]
    %v59 = vld [vmem:[#allocation5] sm:$0xf]
    %v60 = vld [vmem:[#allocation5 + $0x4] sm:$0xf]
    %v61 = vld [vmem:[#allocation5 + $0x8] sm:$0xf]
    %v62 = vld [vmem:[#allocation5 + $0xc] sm:$0xf]
    %v63 = vld [vmem:[#allocation5 + $0x10] sm:$0xf]
    %v64 = vld [vmem:[#allocation5 + $0x14] sm:$0xf]
    %v65 = vld [vmem:[#allocation5 + $0x18] sm:$0xf]
    %v66 = vld [vmem:[#allocation5 + $0x1c] sm:$0xf]
    %v67 = vld [vmem:[#allocation5 + $0x20] sm:$0xf]
    %v68 = vld [vmem:[#allocation5 + $0x24] sm:$0xf]
    %v69 = vld [vmem:[#allocation5 + $0x28] sm:$0xf]
    %v70 = vld [vmem:[#allocation5 + $0x2c] sm:$0xf]
    %v71 = vld [vmem:[#allocation5 + $0x30] sm:$0xf]
    %v72 = vld [vmem:[#allocation5 + $0x34] sm:$0xf]
    %v73 = vld [vmem:[#allocation5 + $0x38] sm:$0xf]
    %v74 = vld [vmem:[#allocation5 + $0x3c] sm:$0xf]
    %v75 = vld [vmem:[#allocation7] sm:$0x1]
    %v77 = vlaneseq
    %v78 = vshrl.u32 %v77, 7
    %v79 = vsub.s32 0, %v78
    %v80 = vrot.slane %v75, %v79
    %v84 = vunpack.c.l.b16 %v57
    %v85 = vunpack.c.l.b16 %v58
    %v86 = vpack.c.b16 %v85, %v84
    %v104 = vunpack.c.l.b16 %v59
    %v105 = vunpack.c.l.b16 %v60
    %v106 = vunpack.c.l.b16 %v61
    %v107 = vunpack.c.l.b16 %v62
    %v108 = vunpack.c.l.b16 %v63
    %v109 = vunpack.c.l.b16 %v64
    %v110 = vunpack.c.l.b16 %v65
    %v111 = vunpack.c.l.b16 %v66
    %v112 = vunpack.c.l.b16 %v67
    %v113 = vunpack.c.l.b16 %v68
    %v114 = vunpack.c.l.b16 %v69
    %v115 = vunpack.c.l.b16 %v70
    %v116 = vunpack.c.l.b16 %v71
    %v117 = vunpack.c.l.b16 %v72
    %v118 = vunpack.c.l.b16 %v73
    %v119 = vunpack.c.l.b16 %v74
    %v120 = vpack.c.b16 %v105, %v104
    %v121 = vpack.c.b16 %v107, %v106
    %v122 = vpack.c.b16 %v109, %v108
    %v123 = vpack.c.b16 %v111, %v110
    %v124 = vpack.c.b16 %v113, %v112
    %v125 = vpack.c.b16 %v115, %v114
    %v126 = vpack.c.b16 %v117, %v116
    %v127 = vpack.c.b16 %v119, %v118
    %136 = vmatprep.subr.bf16.mxu0 0
    %137 = vmatpush1.bf16.msra.mxu0 %v120
    %138 = vmatprep.subr.bf16.mxu0 0
    %139 = vmatpush1.bf16.msra.mxu0 %v121
    %140 = vmatprep.subr.bf16.mxu0 0
    %141 = vmatpush1.bf16.msra.mxu0 %v122
    %142 = vmatprep.subr.bf16.mxu0 0
    %143 = vmatpush1.bf16.msra.mxu0 %v123
    %144 = vmatprep.subr.bf16.mxu0 0
    %145 = vmatpush1.bf16.msra.mxu0 %v124
    %146 = vmatprep.subr.bf16.mxu0 0
    %147 = vmatpush1.bf16.msra.mxu0 %v125
    %148 = vmatprep.subr.bf16.mxu0 0
    %149 = vmatpush1.bf16.msra.mxu0 %v126
    %150 = vmatprep.subr.bf16.mxu0 0
    %151 = vmatpush1.bf16.msra.mxu0 %v127
    %152 = vmatprep.subr.bf16.mxu0 0
    %153 = vmatpush1.bf16.msra.mxu0 0
    %154 = vmatprep.subr.bf16.mxu0 0
    %155 = vmatpush1.bf16.msra.mxu0 0
    %156 = vmatprep.subr.bf16.mxu0 0
    %157 = vmatpush1.bf16.msra.mxu0 0
    %158 = vmatprep.subr.bf16.mxu0 0
    %159 = vmatpush1.bf16.msra.mxu0 0
    %160 = vmatprep.subr.bf16.mxu0 0
    %161 = vmatpush1.bf16.msra.mxu0 0
    %162 = vmatprep.subr.bf16.mxu0 0
    %163 = vmatpush1.bf16.msra.mxu0 0
    %164 = vmatprep.subr.bf16.mxu0 0
    %165 = vmatpush1.bf16.msra.mxu0 0
    %166 = vmatprep.subr.bf16.mxu0 0
    %167 = vmatpush1.bf16.msra.mxu0 0
    %168 = vmatprep.mubr.bf16.mxu0 0
    %169 = vmatmul.mubr.bf16.gmra.mrb[0].mxu0 %v86
    %v170 = vpop.f32.mrb[0].mxu0
    %v171 = vadd.f32 %v80, %v170
    %v172 = vpop.f32.mrb[0].mxu0
    %v173 = vpop.f32.mrb[0].mxu0
    %v174 = vadd.f32 %v80, %v173
    %v175 = vpop.f32.mrb[0].mxu0
    %176 = vdwg.mxu0
    %v177 = vtanh.pop %v171
    %v178 = vtanh.pop %v174
    %v179 = vpack.c.bf16 %v178, %v177
    %s180 = scalar_lea.vmem [#allocation5], 64
    %v181 = vld [vmem:[%s180] sm:$0xf]
    %v182 = vld [vmem:[%s180 + $0x4] sm:$0xf]
    %v183 = vld [vmem:[%s180 + $0x8] sm:$0xf]
    %v184 = vld [vmem:[%s180 + $0xc] sm:$0xf]
    %v185 = vld [vmem:[%s180 + $0x10] sm:$0xf]
    %v186 = vld [vmem:[%s180 + $0x14] sm:$0xf]
    %v187 = vld [vmem:[%s180 + $0x18] sm:$0xf]
    %v188 = vld [vmem:[%s180 + $0x1c] sm:$0xf]
    %v189 = vld [vmem:[%s180 + $0x20] sm:$0xf]
    %v190 = vld [vmem:[%s180 + $0x24] sm:$0xf]
    %v191 = vld [vmem:[%s180 + $0x28] sm:$0xf]
    %v192 = vld [vmem:[%s180 + $0x2c] sm:$0xf]
    %v193 = vld [vmem:[%s180 + $0x30] sm:$0xf]
    %v194 = vld [vmem:[%s180 + $0x34] sm:$0xf]
    %v195 = vld [vmem:[%s180 + $0x38] sm:$0xf]
    %v196 = vld [vmem:[%s180 + $0x3c] sm:$0xf]
    %s197 = scalar_lea.vmem [#allocation7], 1
    %v198 = vld [vmem:[%s197] sm:$0x1]
    %v200 = vlaneseq
    %v201 = vshrl.u32 %v200, 7
    %v202 = vsub.s32 0, %v201
    %v203 = vrot.slane %v198, %v202
    %v221 = vunpack.c.l.b16 %v181
    %v222 = vunpack.c.l.b16 %v182
    %v223 = vunpack.c.l.b16 %v183
    %v224 = vunpack.c.l.b16 %v184
    %v225 = vunpack.c.l.b16 %v185
    %v226 = vunpack.c.l.b16 %v186
    %v227 = vunpack.c.l.b16 %v187
    %v228 = vunpack.c.l.b16 %v188
    %v229 = vunpack.c.l.b16 %v189
    %v230 = vunpack.c.l.b16 %v190
    %v231 = vunpack.c.l.b16 %v191
    %v232 = vunpack.c.l.b16 %v192
    %v233 = vunpack.c.l.b16 %v193
    %v234 = vunpack.c.l.b16 %v194
    %v235 = vunpack.c.l.b16 %v195
    %v236 = vunpack.c.l.b16 %v196
    %v237 = vpack.c.b16 %v222, %v221
    %v238 = vpack.c.b16 %v224, %v223
    %v239 = vpack.c.b16 %v226, %v225
    %v240 = vpack.c.b16 %v228, %v227
    %v241 = vpack.c.b16 %v230, %v229
    %v242 = vpack.c.b16 %v232, %v231
    %v243 = vpack.c.b16 %v234, %v233
    %v244 = vpack.c.b16 %v236, %v235
    %253 = vmatprep.subr.bf16.mxu0 0
    %254 = vmatpush1.bf16.msra.mxu0 %v237
    %255 = vmatprep.subr.bf16.mxu0 0
    %256 = vmatpush1.bf16.msra.mxu0 %v238
    %257 = vmatprep.subr.bf16.mxu0 0
    %258 = vmatpush1.bf16.msra.mxu0 %v239
    %259 = vmatprep.subr.bf16.mxu0 0
    %260 = vmatpush1.bf16.msra.mxu0 %v240
    %261 = vmatprep.subr.bf16.mxu0 0
    %262 = vmatpush1.bf16.msra.mxu0 %v241
    %263 = vmatprep.subr.bf16.mxu0 0
    %264 = vmatpush1.bf16.msra.mxu0 %v242
    %265 = vmatprep.subr.bf16.mxu0 0
    %266 = vmatpush1.bf16.msra.mxu0 %v243
    %267 = vmatprep.subr.bf16.mxu0 0
    %268 = vmatpush1.bf16.msra.mxu0 %v244
    %269 = vmatprep.subr.bf16.mxu0 0
    %270 = vmatpush1.bf16.msra.mxu0 0
    %271 = vmatprep.subr.bf16.mxu0 0
    %272 = vmatpush1.bf16.msra.mxu0 0
    %273 = vmatprep.subr.bf16.mxu0 0
    %274 = vmatpush1.bf16.msra.mxu0 0
    %275 = vmatprep.subr.bf16.mxu0 0
    %276 = vmatpush1.bf16.msra.mxu0 0
    %277 = vmatprep.subr.bf16.mxu0 0
    %278 = vmatpush1.bf16.msra.mxu0 0
    %279 = vmatprep.subr.bf16.mxu0 0
    %280 = vmatpush1.bf16.msra.mxu0 0
    %281 = vmatprep.subr.bf16.mxu0 0
    %282 = vmatpush1.bf16.msra.mxu0 0
    %283 = vmatprep.subr.bf16.mxu0 0
    %284 = vmatpush1.bf16.msra.mxu0 0
    %285 = vmatprep.mubr.bf16.mxu0 0
    %286 = vmatmul.mubr.bf16.gmra.mrb[0].mxu0 %v179
    %v287 = vpop.f32.mrb[0].mxu0
    %v288 = vadd.f32 %v203, %v287
    %v289 = vpop.f32.mrb[0].mxu0
    %v290 = vpop.f32.mrb[0].mxu0
    %v291 = vadd.f32 %v203, %v290
    %v292 = vpop.f32.mrb[0].mxu0
    %293 = vdwg.mxu0
    %v294 = vtanh.pop %v288
    %v295 = vtanh.pop %v291
    %v296 = vpack.c.bf16 %v295, %v294
    %s297 = scalar_lea.vmem [#allocation5], 128
    %v298 = vld [vmem:[%s297] sm:$0xf]
    %v299 = vld [vmem:[%s297 + $0x4] sm:$0xf]
    %v300 = vld [vmem:[%s297 + $0x8] sm:$0xf]
    %v301 = vld [vmem:[%s297 + $0xc] sm:$0xf]
    %v302 = vld [vmem:[%s297 + $0x10] sm:$0xf]
    %v303 = vld [vmem:[%s297 + $0x14] sm:$0xf]
    %v304 = vld [vmem:[%s297 + $0x18] sm:$0xf]
    %v305 = vld [vmem:[%s297 + $0x1c] sm:$0xf]
    %v306 = vld [vmem:[%s297 + $0x20] sm:$0xf]
    %v307 = vld [vmem:[%s297 + $0x24] sm:$0xf]
    %v308 = vld [vmem:[%s297 + $0x28] sm:$0xf]
    %v309 = vld [vmem:[%s297 + $0x2c] sm:$0xf]
    %v310 = vld [vmem:[%s297 + $0x30] sm:$0xf]
    %v311 = vld [vmem:[%s297 + $0x34] sm:$0xf]
    %v312 = vld [vmem:[%s297 + $0x38] sm:$0xf]
    %v313 = vld [vmem:[%s297 + $0x3c] sm:$0xf]
    %s314 = scalar_lea.vmem [#allocation7], 2
    %v315 = vld [vmem:[%s314] sm:$0x1]
    %v317 = vlaneseq
    %v318 = vshrl.u32 %v317, 7
    %v319 = vsub.s32 0, %v318
    %v320 = vrot.slane %v315, %v319
    %v338 = vunpack.c.l.b16 %v298
    %v339 = vunpack.c.l.b16 %v299
    %v340 = vunpack.c.l.b16 %v300
    %v341 = vunpack.c.l.b16 %v301
    %v342 = vunpack.c.l.b16 %v302
    %v343 = vunpack.c.l.b16 %v303
    %v344 = vunpack.c.l.b16 %v304
    %v345 = vunpack.c.l.b16 %v305
    %v346 = vunpack.c.l.b16 %v306
    %v347 = vunpack.c.l.b16 %v307
    %v348 = vunpack.c.l.b16 %v308
    %v349 = vunpack.c.l.b16 %v309
    %v350 = vunpack.c.l.b16 %v310
    %v351 = vunpack.c.l.b16 %v311
    %v352 = vunpack.c.l.b16 %v312
    %v353 = vunpack.c.l.b16 %v313
    %v354 = vpack.c.b16 %v339, %v338
    %v355 = vpack.c.b16 %v341, %v340
    %v356 = vpack.c.b16 %v343, %v342
    %v357 = vpack.c.b16 %v345, %v344
    %v358 = vpack.c.b16 %v347, %v346
    %v359 = vpack.c.b16 %v349, %v348
    %v360 = vpack.c.b16 %v351, %v350
    %v361 = vpack.c.b16 %v353, %v352
    %370 = vmatprep.subr.bf16.mxu0 0
    %371 = vmatpush1.bf16.msra.mxu0 %v354
    %372 = vmatprep.subr.bf16.mxu0 0
    %373 = vmatpush1.bf16.msra.mxu0 %v355
    %374 = vmatprep.subr.bf16.mxu0 0
    %375 = vmatpush1.bf16.msra.mxu0 %v356
    %376 = vmatprep.subr.bf16.mxu0 0
    %377 = vmatpush1.bf16.msra.mxu0 %v357
    %378 = vmatprep.subr.bf16.mxu0 0
    %379 = vmatpush1.bf16.msra.mxu0 %v358
    %380 = vmatprep.subr.bf16.mxu0 0
    %381 = vmatpush1.bf16.msra.mxu0 %v359
    %382 = vmatprep.subr.bf16.mxu0 0
    %383 = vmatpush1.bf16.msra.mxu0 %v360
    %384 = vmatprep.subr.bf16.mxu0 0
    %385 = vmatpush1.bf16.msra.mxu0 %v361
    %386 = vmatprep.subr.bf16.mxu0 0
    %387 = vmatpush1.bf16.msra.mxu0 0
    %388 = vmatprep.subr.bf16.mxu0 0
    %389 = vmatpush1.bf16.msra.mxu0 0
    %390 = vmatprep.subr.bf16.mxu0 0
    %391 = vmatpush1.bf16.msra.mxu0 0
    %392 = vmatprep.subr.bf16.mxu0 0
    %393 = vmatpush1.bf16.msra.mxu0 0
    %394 = vmatprep.subr.bf16.mxu0 0
    %395 = vmatpush1.bf16.msra.mxu0 0
    %396 = vmatprep.subr.bf16.mxu0 0
    %397 = vmatpush1.bf16.msra.mxu0 0
    %398 = vmatprep.subr.bf16.mxu0 0
    %399 = vmatpush1.bf16.msra.mxu0 0
    %400 = vmatprep.subr.bf16.mxu0 0
    %401 = vmatpush1.bf16.msra.mxu0 0
    %402 = vmatprep.mubr.bf16.mxu0 0
    %403 = vmatmul.mubr.bf16.gmra.mrb[0].mxu0 %v296
    %v404 = vpop.f32.mrb[0].mxu0
    %v405 = vadd.f32 %v320, %v404
    %v406 = vpop.f32.mrb[0].mxu0
    %v407 = vpop.f32.mrb[0].mxu0
    %v408 = vadd.f32 %v320, %v407
    %v409 = vpop.f32.mrb[0].mxu0
    %410 = vdwg.mxu0
    %v411 = vtanh.pop %v405
    %v412 = vtanh.pop %v408
    %v413 = vpack.c.bf16 %v412, %v411
    %s414 = scalar_lea.vmem [#allocation5], 192
    %v415 = vld [vmem:[%s414] sm:$0xf]
    %v416 = vld [vmem:[%s414 + $0x4] sm:$0xf]
    %v417 = vld [vmem:[%s414 + $0x8] sm:$0xf]
    %v418 = vld [vmem:[%s414 + $0xc] sm:$0xf]
    %v419 = vld [vmem:[%s414 + $0x10] sm:$0xf]
    %v420 = vld [vmem:[%s414 + $0x14] sm:$0xf]
    %v421 = vld [vmem:[%s414 + $0x18] sm:$0xf]
    %v422 = vld [vmem:[%s414 + $0x1c] sm:$0xf]
    %v423 = vld [vmem:[%s414 + $0x20] sm:$0xf]
    %v424 = vld [vmem:[%s414 + $0x24] sm:$0xf]
    %v425 = vld [vmem:[%s414 + $0x28] sm:$0xf]
    %v426 = vld [vmem:[%s414 + $0x2c] sm:$0xf]
    %v427 = vld [vmem:[%s414 + $0x30] sm:$0xf]
    %v428 = vld [vmem:[%s414 + $0x34] sm:$0xf]
    %v429 = vld [vmem:[%s414 + $0x38] sm:$0xf]
    %v430 = vld [vmem:[%s414 + $0x3c] sm:$0xf]
    %s431 = scalar_lea.vmem [#allocation7], 3
    %v432 = vld [vmem:[%s431] sm:$0x1]
    %v434 = vlaneseq
    %v435 = vshrl.u32 %v434, 7
    %v436 = vsub.s32 0, %v435
    %v437 = vrot.slane %v432, %v436
    %v455 = vunpack.c.l.b16 %v415
    %v456 = vunpack.c.l.b16 %v416
    %v457 = vunpack.c.l.b16 %v417
    %v458 = vunpack.c.l.b16 %v418
    %v459 = vunpack.c.l.b16 %v419
    %v460 = vunpack.c.l.b16 %v420
    %v461 = vunpack.c.l.b16 %v421
    %v462 = vunpack.c.l.b16 %v422
    %v463 = vunpack.c.l.b16 %v423
    %v464 = vunpack.c.l.b16 %v424
    %v465 = vunpack.c.l.b16 %v425
    %v466 = vunpack.c.l.b16 %v426
    %v467 = vunpack.c.l.b16 %v427
    %v468 = vunpack.c.l.b16 %v428
    %v469 = vunpack.c.l.b16 %v429
    %v470 = vunpack.c.l.b16 %v430
    %v471 = vpack.c.b16 %v456, %v455
    %v472 = vpack.c.b16 %v458, %v457
    %v473 = vpack.c.b16 %v460, %v459
    %v474 = vpack.c.b16 %v462, %v461
    %v475 = vpack.c.b16 %v464, %v463
    %v476 = vpack.c.b16 %v466, %v465
    %v477 = vpack.c.b16 %v468, %v467
    %v478 = vpack.c.b16 %v470, %v469
    %487 = vmatprep.subr.bf16.mxu0 0
    %488 = vmatpush1.bf16.msra.mxu0 %v471
    %489 = vmatprep.subr.bf16.mxu0 0
    %490 = vmatpush1.bf16.msra.mxu0 %v472
    %491 = vmatprep.subr.bf16.mxu0 0
    %492 = vmatpush1.bf16.msra.mxu0 %v473
    %493 = vmatprep.subr.bf16.mxu0 0
    %494 = vmatpush1.bf16.msra.mxu0 %v474
    %495 = vmatprep.subr.bf16.mxu0 0
    %496 = vmatpush1.bf16.msra.mxu0 %v475
    %497 = vmatprep.subr.bf16.mxu0 0
    %498 = vmatpush1.bf16.msra.mxu0 %v476
    %499 = vmatprep.subr.bf16.mxu0 0
    %500 = vmatpush1.bf16.msra.mxu0 %v477
    %501 = vmatprep.subr.bf16.mxu0 0
    %502 = vmatpush1.bf16.msra.mxu0 %v478
    %503 = vmatprep.subr.bf16.mxu0 0
    %504 = vmatpush1.bf16.msra.mxu0 0
    %505 = vmatprep.subr.bf16.mxu0 0
    %506 = vmatpush1.bf16.msra.mxu0 0
    %507 = vmatprep.subr.bf16.mxu0 0
    %508 = vmatpush1.bf16.msra.mxu0 0
    %509 = vmatprep.subr.bf16.mxu0 0
    %510 = vmatpush1.bf16.msra.mxu0 0
    %511 = vmatprep.subr.bf16.mxu0 0
    %512 = vmatpush1.bf16.msra.mxu0 0
    %513 = vmatprep.subr.bf16.mxu0 0
    %514 = vmatpush1.bf16.msra.mxu0 0
    %515 = vmatprep.subr.bf16.mxu0 0
    %516 = vmatpush1.bf16.msra.mxu0 0
    %517 = vmatprep.subr.bf16.mxu0 0
    %518 = vmatpush1.bf16.msra.mxu0 0
    %519 = vmatprep.mubr.bf16.mxu0 0
    %520 = vmatmul.mubr.bf16.gmra.mrb[0].mxu0 %v413
    %v521 = vpop.f32.mrb[0].mxu0
    %v522 = vadd.f32 %v437, %v521
    %v523 = vpop.f32.mrb[0].mxu0
    %v524 = vpop.f32.mrb[0].mxu0
    %v525 = vadd.f32 %v437, %v524
    %v526 = vpop.f32.mrb[0].mxu0
    %527 = vdwg.mxu0
    %v528 = vtanh.pop %v522
    %v529 = vtanh.pop %v525
    %530 = vst [vmem:[#allocation8] sm:$0xff] %v528
    %531 = vst [vmem:[#allocation8 + $0x8] sm:$0xff] %v529
    // Predicated region
    $region26: #{tpu_custom_call.1} parent=1 // pred_check
      _
    $region27: #{tpu_custom_call.1} parent=1 // pred_check_branch
      %533 = sbr.rel (0) target = $region29
    $region28: #{tpu_custom_call.1} parent=1 // pred_region
      %s535 = ssub.s32 256, 256
      %536 = vsyncadd [#allocation4], %s535
      %s537 = sshll.u32 [#allocation8], 4
      %s538 = int_to_ptr.vmem [resolvable:$true] %s537
      %543 = dma.vmem_to_hbm [thread:$0]  %s538, 256, %s3, [#allocation4], 128, 128, 8
    $region29: #{tpu_custom_call.1} parent=1 // pred_fallthru
      _
    // Predicated region
    $region30: #{tpu_custom_call.1} parent=1 // pred_check
      _
    $region31: #{tpu_custom_call.1} parent=1 // pred_check_branch
      %545 = sbr.rel (0) target = $region33
    $region32: #{tpu_custom_call.1} parent=1 // pred_region
      %546 = dma.done [#allocation4], 256
    $region33: #{tpu_custom_call.1} parent=1 // pred_fallthru
      _
    %547 = vsyncpa [#allocation3], 1
    %548 = vsyncpa [#allocation6], 1
    %549 = vsyncpa [#allocation4], 1

// kernel: tpu_custom_call.1
$region0: #{tpu_custom_call.1}
  #allocation0 [shape = 'u32[]', space=smem, size = 0x4, offset = 0x4, fixed_abs, tag = 'smem constant byte address 0x4 - core index']
  #allocation1 [shape = 'u32[144,128]{1,0:T(1,128)}', space=vmem, size = 0x12000, scoped, tag = 'internal scratch']
  %s0 = inlined_call_operand.hbm [shape: bf16[16,128], index: 0, kind: input, shape index: {}]
  %s1 = inlined_call_operand.hbm [shape: bf16[4,128,128], index: 1, kind: input, shape index: {}]
  %s2 = inlined_call_operand.hbm [shape: f32[4,1,128], index: 2, kind: input, shape index: {}]
  %s3 = inlined_call_operand.hbm [shape: f32[16,128], index: 3, kind: output, shape index: {}]
  %s4 = sld [smem:[#allocation0]]
  $region34: #{tpu_custom_call.1} parent=0
    _
  %s6 = ssub.s32 1, %s4
  %s7 = scalar_select 0, %s6, %s4
  $region1: #{tpu_custom_call.1} parent=0
    #allocation2 [shape = 'u8[4096]{0}', space=vmem, size = 0x1000, scoped, tag = 'input window, operand 0, single buffered']
    #allocation3 [shape = 's32[1]{0}', space=sflag, size = 0x4, scoped, tag = 'scoped memory for tpu_custom_call.1']
    #allocation4 [shape = 's32[1]{0}', space=sflag, size = 0x4, scoped, tag = 'scoped memory for tpu_custom_call.1']
    #allocation5 [shape = 'u8[131072]{0}', space=vmem, size = 0x20000, scoped, tag = 'input window, operand 1, single buffered']
    #allocation6 [shape = 's32[1]{0}', space=sflag, size = 0x4, scoped, tag = 'scoped memory for tpu_custom_call.1']
    #allocation7 [shape = 'u8[2048]{0}', space=vmem, size = 0x800, scoped, tag = 'input window, operand 2, single buffered']
    #allocation8 [shape = 'u8[8192]{0}', space=vmem, size = 0x2000, scoped, tag = 'output window, operand 0, single buffered']
    %8 = vsyncpa [#allocation3], 0
    %9 = vsyncpa [#allocation6], 0
    %10 = vsyncpa [#allocation4], 0
    // Predicated region
    $region2: #{tpu_custom_call.1} parent=1 // pred_check
      _
    $region3: #{tpu_custom_call.1} parent=1 // pred_check_branch
      %12 = sbr.rel (0) target = $region5
    $region4: #{tpu_custom_call.1} parent=1 // pred_region
      %s14 = ssub.s32 128, 128
      %15 = vsyncadd [#allocation3], %s14
      %s16 = sshll.u32 [#allocation2], 4
      %s17 = int_to_ptr.vmem [resolvable:$true] %s16
      %22 = dma.hbm_to_vmem [thread:$0]  %s0, 128, %s17, [#allocation3], 64, 64, 4
    $region5: #{tpu_custom_call.1} parent=1 // pred_fallthru
      _
    // Predicated region
    $region6: #{tpu_custom_call.1} parent=1 // pred_check
      _
    $region7: #{tpu_custom_call.1} parent=1 // pred_check_branch
      %24 = sbr.rel (0) target = $region9
    $region8: #{tpu_custom_call.1} parent=1 // pred_region
      %s26 = ssub.s32 4096, 4096
      %27 = vsyncadd [#allocation6], %s26
      %s28 = sshll.u32 [#allocation5], 4
      %s29 = int_to_ptr.vmem [resolvable:$true] %s28
      %34 = dma.hbm_to_vmem [thread:$0]  %s1, 4096, %s29, [#allocation6], 64, 64, 4
    $region9: #{tpu_custom_call.1} parent=1 // pred_fallthru
      _
    // Predicated region
    $region10: #{tpu_custom_call.1} parent=1 // pred_check
      _
    $region11: #{tpu_custom_call.1} parent=1 // pred_check_branch
      %36 = sbr.rel (0) target = $region13
    $region12: #{tpu_custom_call.1} parent=1 // pred_region
      %s38 = ssub.s32 64, 64
      %39 = vsyncadd [#allocation6], %s38
      %s40 = sshll.u32 [#allocation7], 4
      %s41 = int_to_ptr.vmem [resolvable:$true] %s40
      %46 = dma.hbm_to_vmem [thread:$0]  %s2, 64, %s41, [#allocation6], 16, 16, 1
    $region13: #{tpu_custom_call.1} parent=1 // pred_fallthru
      _
    // Predicated region
    $region14: #{tpu_custom_call.1} parent=1 // pred_check
      _
    $region15: #{tpu_custom_call.1} parent=1 // pred_check_branch
      %48 = sbr.rel (0) target = $region17
    $region16: #{tpu_custom_call.1} parent=1 // pred_region
      %49 = dma.done [#allocation3], 128
    $region17: #{tpu_custom_call.1} parent=1 // pred_fallthru
      _
    // Predicated region
    $region18: #{tpu_custom_call.1} parent=1 // pred_check
      _
    $region19: #{tpu_custom_call.1} parent=1 // pred_check_branch
      %51 = sbr.rel (0) target = $region21
    $region20: #{tpu_custom_call.1} parent=1 // pred_region
      %52 = dma.done [#allocation6], 4096
    $region21: #{tpu_custom_call.1} parent=1 // pred_fallthru
      _
    // Predicated region
    $region22: #{tpu_custom_call.1} parent=1 // pred_check
      _
    $region23: #{tpu_custom_call.1} parent=1 // pred_check_branch
      %54 = sbr.rel (0) target = $region25
    $region24: #{tpu_custom_call.1} parent=1 // pred_region
      %55 = dma.done [#allocation6], 64
    $region25: #{tpu_custom_call.1} parent=1 // pred_fallthru
      _
    %v57 = vld [vmem:[#allocation2] sm:$0xf]
    %v58 = vld [vmem:[#allocation2 + $0x4] sm:$0xf]
    %v59 = vld [vmem:[#allocation5] sm:$0xf]
    %v60 = vld [vmem:[#allocation5 + $0x4] sm:$0xf]
    %v61 = vld [vmem:[#allocation5 + $0x8] sm:$0xf]
    %v62 = vld [vmem:[#allocation5 + $0xc] sm:$0xf]
    %v63 = vld [vmem:[#allocation5 + $0x10] sm:$0xf]
    %v64 = vld [vmem:[#allocation5 + $0x14] sm:$0xf]
    %v65 = vld [vmem:[#allocation5 + $0x18] sm:$0xf]
    %v66 = vld [vmem:[#allocation5 + $0x1c] sm:$0xf]
    %v67 = vld [vmem:[#allocation5 + $0x20] sm:$0xf]
    %v68 = vld [vmem:[#allocation5 + $0x24] sm:$0xf]
    %v69 = vld [vmem:[#allocation5 + $0x28] sm:$0xf]
    %v70 = vld [vmem:[#allocation5 + $0x2c] sm:$0xf]
    %v71 = vld [vmem:[#allocation5 + $0x30] sm:$0xf]
    %v72 = vld [vmem:[#allocation5 + $0x34] sm:$0xf]
    %v73 = vld [vmem:[#allocation5 + $0x38] sm:$0xf]
    %v74 = vld [vmem:[#allocation5 + $0x3c] sm:$0xf]
    %v75 = vld [vmem:[#allocation7] sm:$0x1]
    %v77 = vlaneseq
    %v78 = vshrl.u32 %v77, 7
    %v79 = vsub.s32 0, %v78
    %v80 = vrot.slane %v75, %v79
    %v84 = vunpack.c.l.b16 %v57
    %v85 = vunpack.c.l.b16 %v58
    %v86 = vpack.c.b16 %v85, %v84
    %v104 = vunpack.c.l.b16 %v59
    %v105 = vunpack.c.l.b16 %v60
    %v106 = vunpack.c.l.b16 %v61
    %v107 = vunpack.c.l.b16 %v62
    %v108 = vunpack.c.l.b16 %v63
    %v109 = vunpack.c.l.b16 %v64
    %v110 = vunpack.c.l.b16 %v65
    %v111 = vunpack.c.l.b16 %v66
    %v112 = vunpack.c.l.b16 %v67
    %v113 = vunpack.c.l.b16 %v68
    %v114 = vunpack.c.l.b16 %v69
    %v115 = vunpack.c.l.b16 %v70
    %v116 = vunpack.c.l.b16 %v71
    %v117 = vunpack.c.l.b16 %v72
    %v118 = vunpack.c.l.b16 %v73
    %v119 = vunpack.c.l.b16 %v74
    %v120 = vpack.c.b16 %v105, %v104
    %v121 = vpack.c.b16 %v107, %v106
    %v122 = vpack.c.b16 %v109, %v108
    %v123 = vpack.c.b16 %v111, %v110
    %v124 = vpack.c.b16 %v113, %v112
    %v125 = vpack.c.b16 %v115, %v114
    %v126 = vpack.c.b16 %v117, %v116
    %v127 = vpack.c.b16 %v119, %v118
    %136 = vmatprep.subr.bf16.mxu0 0
    %137 = vmatpush1.bf16.msra.mxu0 %v120
    %138 = vmatprep.subr.bf16.mxu0 0
    %139 = vmatpush1.bf16.msra.mxu0 %v121
    %140 = vmatprep.subr.bf16.mxu0 0
    %141 = vmatpush1.bf16.msra.mxu0 %v122
    %142 = vmatprep.subr.bf16.mxu0 0
    %143 = vmatpush1.bf16.msra.mxu0 %v123
    %144 = vmatprep.subr.bf16.mxu0 0
    %145 = vmatpush1.bf16.msra.mxu0 %v124
    %146 = vmatprep.subr.bf16.mxu0 0
    %147 = vmatpush1.bf16.msra.mxu0 %v125
    %148 = vmatprep.subr.bf16.mxu0 0
    %149 = vmatpush1.bf16.msra.mxu0 %v126
    %150 = vmatprep.subr.bf16.mxu0 0
    %151 = vmatpush1.bf16.msra.mxu0 %v127
    %152 = vmatprep.subr.bf16.mxu0 0
    %153 = vmatpush1.bf16.msra.mxu0 0
    %154 = vmatprep.subr.bf16.mxu0 0
    %155 = vmatpush1.bf16.msra.mxu0 0
    %156 = vmatprep.subr.bf16.mxu0 0
    %157 = vmatpush1.bf16.msra.mxu0 0
    %158 = vmatprep.subr.bf16.mxu0 0
    %159 = vmatpush1.bf16.msra.mxu0 0
    %160 = vmatprep.subr.bf16.mxu0 0
    %161 = vmatpush1.bf16.msra.mxu0 0
    %162 = vmatprep.subr.bf16.mxu0 0
    %163 = vmatpush1.bf16.msra.mxu0 0
    %164 = vmatprep.subr.bf16.mxu0 0
    %165 = vmatpush1.bf16.msra.mxu0 0
    %166 = vmatprep.subr.bf16.mxu0 0
    %167 = vmatpush1.bf16.msra.mxu0 0
    %168 = vmatprep.mubr.bf16.mxu0 0
    %169 = vmatmul.mubr.bf16.gmra.mrb[0].mxu0 %v86
    %v170 = vpop.f32.mrb[0].mxu0
    %v171 = vadd.f32 %v80, %v170
    %v172 = vpop.f32.mrb[0].mxu0
    %v173 = vpop.f32.mrb[0].mxu0
    %v174 = vadd.f32 %v80, %v173
    %v175 = vpop.f32.mrb[0].mxu0
    %176 = vdwg.mxu0
    %v177 = vtanh.pop %v171
    %v178 = vtanh.pop %v174
    %v179 = vpack.c.bf16 %v178, %v177
    %s180 = scalar_lea.vmem [#allocation5], 64
    %v181 = vld [vmem:[%s180] sm:$0xf]
    %v182 = vld [vmem:[%s180 + $0x4] sm:$0xf]
    %v183 = vld [vmem:[%s180 + $0x8] sm:$0xf]
    %v184 = vld [vmem:[%s180 + $0xc] sm:$0xf]
    %v185 = vld [vmem:[%s180 + $0x10] sm:$0xf]
    %v186 = vld [vmem:[%s180 + $0x14] sm:$0xf]
    %v187 = vld [vmem:[%s180 + $0x18] sm:$0xf]
    %v188 = vld [vmem:[%s180 + $0x1c] sm:$0xf]
    %v189 = vld [vmem:[%s180 + $0x20] sm:$0xf]
    %v190 = vld [vmem:[%s180 + $0x24] sm:$0xf]
    %v191 = vld [vmem:[%s180 + $0x28] sm:$0xf]
    %v192 = vld [vmem:[%s180 + $0x2c] sm:$0xf]
    %v193 = vld [vmem:[%s180 + $0x30] sm:$0xf]
    %v194 = vld [vmem:[%s180 + $0x34] sm:$0xf]
    %v195 = vld [vmem:[%s180 + $0x38] sm:$0xf]
    %v196 = vld [vmem:[%s180 + $0x3c] sm:$0xf]
    %s197 = scalar_lea.vmem [#allocation7], 1
    %v198 = vld [vmem:[%s197] sm:$0x1]
    %v200 = vlaneseq
    %v201 = vshrl.u32 %v200, 7
    %v202 = vsub.s32 0, %v201
    %v203 = vrot.slane %v198, %v202
    %v221 = vunpack.c.l.b16 %v181
    %v222 = vunpack.c.l.b16 %v182
    %v223 = vunpack.c.l.b16 %v183
    %v224 = vunpack.c.l.b16 %v184
    %v225 = vunpack.c.l.b16 %v185
    %v226 = vunpack.c.l.b16 %v186
    %v227 = vunpack.c.l.b16 %v187
    %v228 = vunpack.c.l.b16 %v188
    %v229 = vunpack.c.l.b16 %v189
    %v230 = vunpack.c.l.b16 %v190
    %v231 = vunpack.c.l.b16 %v191
    %v232 = vunpack.c.l.b16 %v192
    %v233 = vunpack.c.l.b16 %v193
    %v234 = vunpack.c.l.b16 %v194
    %v235 = vunpack.c.l.b16 %v195
    %v236 = vunpack.c.l.b16 %v196
    %v237 = vpack.c.b16 %v222, %v221
    %v238 = vpack.c.b16 %v224, %v223
    %v239 = vpack.c.b16 %v226, %v225
    %v240 = vpack.c.b16 %v228, %v227
    %v241 = vpack.c.b16 %v230, %v229
    %v242 = vpack.c.b16 %v232, %v231
    %v243 = vpack.c.b16 %v234, %v233
    %v244 = vpack.c.b16 %v236, %v235
    %253 = vmatprep.subr.bf16.mxu0 0
    %254 = vmatpush1.bf16.msra.mxu0 %v237
    %255 = vmatprep.subr.bf16.mxu0 0
    %256 = vmatpush1.bf16.msra.mxu0 %v238
    %257 = vmatprep.subr.bf16.mxu0 0
    %258 = vmatpush1.bf16.msra.mxu0 %v239
    %259 = vmatprep.subr.bf16.mxu0 0
    %260 = vmatpush1.bf16.msra.mxu0 %v240
    %261 = vmatprep.subr.bf16.mxu0 0
    %262 = vmatpush1.bf16.msra.mxu0 %v241
    %263 = vmatprep.subr.bf16.mxu0 0
    %264 = vmatpush1.bf16.msra.mxu0 %v242
    %265 = vmatprep.subr.bf16.mxu0 0
    %266 = vmatpush1.bf16.msra.mxu0 %v243
    %267 = vmatprep.subr.bf16.mxu0 0
    %268 = vmatpush1.bf16.msra.mxu0 %v244
    %269 = vmatprep.subr.bf16.mxu0 0
    %270 = vmatpush1.bf16.msra.mxu0 0
    %271 = vmatprep.subr.bf16.mxu0 0
    %272 = vmatpush1.bf16.msra.mxu0 0
    %273 = vmatprep.subr.bf16.mxu0 0
    %274 = vmatpush1.bf16.msra.mxu0 0
    %275 = vmatprep.subr.bf16.mxu0 0
    %276 = vmatpush1.bf16.msra.mxu0 0
    %277 = vmatprep.subr.bf16.mxu0 0
    %278 = vmatpush1.bf16.msra.mxu0 0
    %279 = vmatprep.subr.bf16.mxu0 0
    %280 = vmatpush1.bf16.msra.mxu0 0
    %281 = vmatprep.subr.bf16.mxu0 0
    %282 = vmatpush1.bf16.msra.mxu0 0
    %283 = vmatprep.subr.bf16.mxu0 0
    %284 = vmatpush1.bf16.msra.mxu0 0
    %285 = vmatprep.mubr.bf16.mxu0 0
    %286 = vmatmul.mubr.bf16.gmra.mrb[0].mxu0 %v179
    %v287 = vpop.f32.mrb[0].mxu0
    %v288 = vadd.f32 %v203, %v287
    %v289 = vpop.f32.mrb[0].mxu0
    %v290 = vpop.f32.mrb[0].mxu0
    %v291 = vadd.f32 %v203, %v290
    %v292 = vpop.f32.mrb[0].mxu0
    %293 = vdwg.mxu0
    %v294 = vtanh.pop %v288
    %v295 = vtanh.pop %v291
    %v296 = vpack.c.bf16 %v295, %v294
    %s297 = scalar_lea.vmem [#allocation5], 128
    %v298 = vld [vmem:[%s297] sm:$0xf]
    %v299 = vld [vmem:[%s297 + $0x4] sm:$0xf]
    %v300 = vld [vmem:[%s297 + $0x8] sm:$0xf]
    %v301 = vld [vmem:[%s297 + $0xc] sm:$0xf]
    %v302 = vld [vmem:[%s297 + $0x10] sm:$0xf]
    %v303 = vld [vmem:[%s297 + $0x14] sm:$0xf]
    %v304 = vld [vmem:[%s297 + $0x18] sm:$0xf]
    %v305 = vld [vmem:[%s297 + $0x1c] sm:$0xf]
    %v306 = vld [vmem:[%s297 + $0x20] sm:$0xf]
    %v307 = vld [vmem:[%s297 + $0x24] sm:$0xf]
    %v308 = vld [vmem:[%s297 + $0x28] sm:$0xf]
    %v309 = vld [vmem:[%s297 + $0x2c] sm:$0xf]
    %v310 = vld [vmem:[%s297 + $0x30] sm:$0xf]
    %v311 = vld [vmem:[%s297 + $0x34] sm:$0xf]
    %v312 = vld [vmem:[%s297 + $0x38] sm:$0xf]
    %v313 = vld [vmem:[%s297 + $0x3c] sm:$0xf]
    %s314 = scalar_lea.vmem [#allocation7], 2
    %v315 = vld [vmem:[%s314] sm:$0x1]
    %v317 = vlaneseq
    %v318 = vshrl.u32 %v317, 7
    %v319 = vsub.s32 0, %v318
    %v320 = vrot.slane %v315, %v319
    %v338 = vunpack.c.l.b16 %v298
    %v339 = vunpack.c.l.b16 %v299
    %v340 = vunpack.c.l.b16 %v300
    %v341 = vunpack.c.l.b16 %v301
    %v342 = vunpack.c.l.b16 %v302
    %v343 = vunpack.c.l.b16 %v303
    %v344 = vunpack.c.l.b16 %v304
    %v345 = vunpack.c.l.b16 %v305
    %v346 = vunpack.c.l.b16 %v306
    %v347 = vunpack.c.l.b16 %v307
    %v348 = vunpack.c.l.b16 %v308
    %v349 = vunpack.c.l.b16 %v309
    %v350 = vunpack.c.l.b16 %v310
    %v351 = vunpack.c.l.b16 %v311
    %v352 = vunpack.c.l.b16 %v312
    %v353 = vunpack.c.l.b16 %v313
    %v354 = vpack.c.b16 %v339, %v338
    %v355 = vpack.c.b16 %v341, %v340
    %v356 = vpack.c.b16 %v343, %v342
    %v357 = vpack.c.b16 %v345, %v344
    %v358 = vpack.c.b16 %v347, %v346
    %v359 = vpack.c.b16 %v349, %v348
    %v360 = vpack.c.b16 %v351, %v350
    %v361 = vpack.c.b16 %v353, %v352
    %370 = vmatprep.subr.bf16.mxu0 0
    %371 = vmatpush1.bf16.msra.mxu0 %v354
    %372 = vmatprep.subr.bf16.mxu0 0
    %373 = vmatpush1.bf16.msra.mxu0 %v355
    %374 = vmatprep.subr.bf16.mxu0 0
    %375 = vmatpush1.bf16.msra.mxu0 %v356
    %376 = vmatprep.subr.bf16.mxu0 0
    %377 = vmatpush1.bf16.msra.mxu0 %v357
    %378 = vmatprep.subr.bf16.mxu0 0
    %379 = vmatpush1.bf16.msra.mxu0 %v358
    %380 = vmatprep.subr.bf16.mxu0 0
    %381 = vmatpush1.bf16.msra.mxu0 %v359
    %382 = vmatprep.subr.bf16.mxu0 0
    %383 = vmatpush1.bf16.msra.mxu0 %v360
    %384 = vmatprep.subr.bf16.mxu0 0
    %385 = vmatpush1.bf16.msra.mxu0 %v361
    %386 = vmatprep.subr.bf16.mxu0 0
    %387 = vmatpush1.bf16.msra.mxu0 0
    %388 = vmatprep.subr.bf16.mxu0 0
    %389 = vmatpush1.bf16.msra.mxu0 0
    %390 = vmatprep.subr.bf16.mxu0 0
    %391 = vmatpush1.bf16.msra.mxu0 0
    %392 = vmatprep.subr.bf16.mxu0 0
    %393 = vmatpush1.bf16.msra.mxu0 0
    %394 = vmatprep.subr.bf16.mxu0 0
    %395 = vmatpush1.bf16.msra.mxu0 0
    %396 = vmatprep.subr.bf16.mxu0 0
    %397 = vmatpush1.bf16.msra.mxu0 0
    %398 = vmatprep.subr.bf16.mxu0 0
    %399 = vmatpush1.bf16.msra.mxu0 0
    %400 = vmatprep.subr.bf16.mxu0 0
    %401 = vmatpush1.bf16.msra.mxu0 0
    %402 = vmatprep.mubr.bf16.mxu0 0
    %403 = vmatmul.mubr.bf16.gmra.mrb[0].mxu0 %v296
    %v404 = vpop.f32.mrb[0].mxu0
    %v405 = vadd.f32 %v320, %v404
    %v406 = vpop.f32.mrb[0].mxu0
    %v407 = vpop.f32.mrb[0].mxu0
    %v408 = vadd.f32 %v320, %v407
    %v409 = vpop.f32.mrb[0].mxu0
    %410 = vdwg.mxu0
    %v411 = vtanh.pop %v405
    %v412 = vtanh.pop %v408
    %v413 = vpack.c.bf16 %v412, %v411
    %s414 = scalar_lea.vmem [#allocation5], 192
    %v415 = vld [vmem:[%s414] sm:$0xf]
    %v416 = vld [vmem:[%s414 + $0x4] sm:$0xf]
    %v417 = vld [vmem:[%s414 + $0x8] sm:$0xf]
    %v418 = vld [vmem:[%s414 + $0xc] sm:$0xf]
    %v419 = vld [vmem:[%s414 + $0x10] sm:$0xf]
    %v420 = vld [vmem:[%s414 + $0x14] sm:$0xf]
    %v421 = vld [vmem:[%s414 + $0x18] sm:$0xf]
    %v422 = vld [vmem:[%s414 + $0x1c] sm:$0xf]
    %v423 = vld [vmem:[%s414 + $0x20] sm:$0xf]
    %v424 = vld [vmem:[%s414 + $0x24] sm:$0xf]
    %v425 = vld [vmem:[%s414 + $0x28] sm:$0xf]
    %v426 = vld [vmem:[%s414 + $0x2c] sm:$0xf]
    %v427 = vld [vmem:[%s414 + $0x30] sm:$0xf]
    %v428 = vld [vmem:[%s414 + $0x34] sm:$0xf]
    %v429 = vld [vmem:[%s414 + $0x38] sm:$0xf]
    %v430 = vld [vmem:[%s414 + $0x3c] sm:$0xf]
    %s431 = scalar_lea.vmem [#allocation7], 3
    %v432 = vld [vmem:[%s431] sm:$0x1]
    %v434 = vlaneseq
    %v435 = vshrl.u32 %v434, 7
    %v436 = vsub.s32 0, %v435
    %v437 = vrot.slane %v432, %v436
    %v455 = vunpack.c.l.b16 %v415
    %v456 = vunpack.c.l.b16 %v416
    %v457 = vunpack.c.l.b16 %v417
    %v458 = vunpack.c.l.b16 %v418
    %v459 = vunpack.c.l.b16 %v419
    %v460 = vunpack.c.l.b16 %v420
    %v461 = vunpack.c.l.b16 %v421
    %v462 = vunpack.c.l.b16 %v422
    %v463 = vunpack.c.l.b16 %v423
    %v464 = vunpack.c.l.b16 %v424
    %v465 = vunpack.c.l.b16 %v425
    %v466 = vunpack.c.l.b16 %v426
    %v467 = vunpack.c.l.b16 %v427
    %v468 = vunpack.c.l.b16 %v428
    %v469 = vunpack.c.l.b16 %v429
    %v470 = vunpack.c.l.b16 %v430
    %v471 = vpack.c.b16 %v456, %v455
    %v472 = vpack.c.b16 %v458, %v457
    %v473 = vpack.c.b16 %v460, %v459
    %v474 = vpack.c.b16 %v462, %v461
    %v475 = vpack.c.b16 %v464, %v463
    %v476 = vpack.c.b16 %v466, %v465
    %v477 = vpack.c.b16 %v468, %v467
    %v478 = vpack.c.b16 %v470, %v469
    %487 = vmatprep.subr.bf16.mxu0 0
    %488 = vmatpush1.bf16.msra.mxu0 %v471
    %489 = vmatprep.subr.bf16.mxu0 0
    %490 = vmatpush1.bf16.msra.mxu0 %v472
    %491 = vmatprep.subr.bf16.mxu0 0
    %492 = vmatpush1.bf16.msra.mxu0 %v473
    %493 = vmatprep.subr.bf16.mxu0 0
    %494 = vmatpush1.bf16.msra.mxu0 %v474
    %495 = vmatprep.subr.bf16.mxu0 0
    %496 = vmatpush1.bf16.msra.mxu0 %v475
    %497 = vmatprep.subr.bf16.mxu0 0
    %498 = vmatpush1.bf16.msra.mxu0 %v476
    %499 = vmatprep.subr.bf16.mxu0 0
    %500 = vmatpush1.bf16.msra.mxu0 %v477
    %501 = vmatprep.subr.bf16.mxu0 0
    %502 = vmatpush1.bf16.msra.mxu0 %v478
    %503 = vmatprep.subr.bf16.mxu0 0
    %504 = vmatpush1.bf16.msra.mxu0 0
    %505 = vmatprep.subr.bf16.mxu0 0
    %506 = vmatpush1.bf16.msra.mxu0 0
    %507 = vmatprep.subr.bf16.mxu0 0
    %508 = vmatpush1.bf16.msra.mxu0 0
    %509 = vmatprep.subr.bf16.mxu0 0
    %510 = vmatpush1.bf16.msra.mxu0 0
    %511 = vmatprep.subr.bf16.mxu0 0
    %512 = vmatpush1.bf16.msra.mxu0 0
    %513 = vmatprep.subr.bf16.mxu0 0
    %514 = vmatpush1.bf16.msra.mxu0 0
    %515 = vmatprep.subr.bf16.mxu0 0
    %516 = vmatpush1.bf16.msra.mxu0 0
    %517 = vmatprep.subr.bf16.mxu0 0
    %518 = vmatpush1.bf16.msra.mxu0 0
    %519 = vmatprep.mubr.bf16.mxu0 0
    %520 = vmatmul.mubr.bf16.gmra.mrb[0].mxu0 %v413
    %v521 = vpop.f32.mrb[0].mxu0
    %v522 = vadd.f32 %v437, %v521
    %v523 = vpop.f32.mrb[0].mxu0
    %v524 = vpop.f32.mrb[0].mxu0
    %v525 = vadd.f32 %v437, %v524
    %v526 = vpop.f32.mrb[0].mxu0
    %527 = vdwg.mxu0
    %v528 = vtanh.pop %v522
    %v529 = vtanh.pop %v525
    %530 = vst [vmem:[#allocation8] sm:$0xff] %v528
    %531 = vst [vmem:[#allocation8 + $0x8] sm:$0xff] %v529
    // Predicated region
    $region26: #{tpu_custom_call.1} parent=1 // pred_check
      _
    $region27: #{tpu_custom_call.1} parent=1 // pred_check_branch
      %533 = sbr.rel (0) target = $region29
    $region28: #{tpu_custom_call.1} parent=1 // pred_region
      %s535 = ssub.s32 256, 256
      %536 = vsyncadd [#allocation4], %s535
      %s537 = sshll.u32 [#allocation8], 4
      %s538 = int_to_ptr.vmem [resolvable:$true] %s537
      %543 = dma.vmem_to_hbm [thread:$0]  %s538, 256, %s3, [#allocation4], 128, 128, 8
    $region29: #{tpu_custom_call.1} parent=1 // pred_fallthru
      _
    // Predicated region
    $region30: #{tpu_custom_call.1} parent=1 // pred_check
      _
    $region31: #{tpu_custom_call.1} parent=1 // pred_check_branch
      %545 = sbr.rel (0) target = $region33
    $region32: #{tpu_custom_call.1} parent=1 // pred_region
      %546 = dma.done [#allocation4], 256
    $region33: #{tpu_custom_call.1} parent=1 // pred_fallthru
      _
    %547 = vsyncpa [#allocation3], 1
    %548 = vsyncpa [#allocation6], 1
    %549 = vsyncpa [#allocation4], 1

</llo_original>
